<compile_context>
chip_gen: v5e
topology: v5e:2x2
jax: 0.10.0
libtpu: 0.0.40
codegen_flags: <defaults>
</compile_context>

<pallas_src>
import functools

import jax
import jax.numpy as jnp
from jax import lax
from jax.experimental import pallas as pl
from jax.experimental.pallas import tpu as pltpu

_NEG_INF = -1e30  # large finite negative: NaN-safe mask fill for online softmax


# ---------------------------------------------------------------------------
# Pass 1: fused QKV projection.
# ---------------------------------------------------------------------------
def qkv_proj_kernel(x_ref, wqkv_ref, q_ref, k_ref, v_ref):
    hd = q_ref.shape[-1]
    x = x_ref[0]                                                  # (tq, C) bf16
    qkv = jnp.dot(x, wqkv_ref[...],
                  preferred_element_type=jnp.float32)             # (tq, 3*hd) f32
    # Slices below land on multiples of 128 lanes -> zero-cost views.
    q_ref[0] = qkv[:, :hd].astype(q_ref.dtype)
    k_ref[0] = qkv[:, hd:2 * hd].astype(k_ref.dtype)
    v_ref[0] = qkv[:, 2 * hd:].astype(v_ref.dtype)


# ---------------------------------------------------------------------------
# Pass 2: flash attention (online softmax over kv tiles) + output projection.
# ---------------------------------------------------------------------------
def flash_mha_kernel(q_ref, k_ref, v_ref, wpt_ref, o_ref,
                     m_ref, l_ref, acc_ref, *, tq, tk):
    qi = pl.program_id(1)
    h = pl.program_id(2)
    ki = pl.program_id(3)
    nk = pl.num_programs(3)

    # Zero the (VMEM-resident) output tile once per (batch, q_tile).
    @pl.when(jnp.logical_and(h == 0, ki == 0))
    def _():
        o_ref[...] = jnp.zeros_like(o_ref)

    # Reset the per-head online-softmax state at the start of each kv sweep.
    @pl.when(ki == 0)
    def _():
        m_ref[...] = jnp.full_like(m_ref, _NEG_INF)
        l_ref[...] = jnp.zeros_like(l_ref)
        acc_ref[...] = jnp.zeros_like(acc_ref)

    # Skip kv blocks entirely in the causal future of this q tile.
    @pl.when(ki * tk < (qi + 1) * tq)
    def _():
        q = q_ref[0]                                              # (tq, Hp) bf16
        k = k_ref[0]                                              # (tk, Hp) bf16
        # q @ k^T without materializing a transpose: contract last dims.
        s = lax.dot_general(q, k, (((1,), (1,)), ((), ())),
                            preferred_element_type=jnp.float32)   # (tq, tk) f32

        # Causal mask in absolute coordinates, built once per grid step.
        rows = qi * tq + lax.broadcasted_iota(jnp.int32, (tq, tk), 0)
        cols = ki * tk + lax.broadcasted_iota(jnp.int32, (tq, tk), 1)
        s = jnp.where(cols <= rows, s, _NEG_INF)

        m_prev = m_ref[...]
        m_new = jnp.maximum(m_prev, jnp.max(s, axis=-1, keepdims=True))
        alpha = jnp.exp(m_prev - m_new)
        p = jnp.exp(s - m_new)
        l_ref[...] = alpha * l_ref[...] + jnp.sum(p, axis=-1, keepdims=True)
        acc_ref[...] = alpha * acc_ref[...] + jnp.dot(
            p.astype(jnp.bfloat16), v_ref[0],
            preferred_element_type=jnp.float32)
        m_ref[...] = m_new

    # Last kv step: normalize and accumulate this head's slice of the output
    # projection directly into the resident output tile (no concat).
    @pl.when(ki == nk - 1)
    def _():
        out_h = acc_ref[...] * pl.reciprocal(l_ref[...], approx=True)  # (tq, Hp)
        o_ref[0] = o_ref[0] + jnp.dot(out_h.astype(jnp.bfloat16), wpt_ref[...],
                                      preferred_element_type=jnp.float32)


# ---------------------------------------------------------------------------
# Wrapper.
# ---------------------------------------------------------------------------
def multi_head_attention(x, wq, wk, wv, wproj, *, seq_tile=256):
    """MultiHeadAttention forward (bias=False, dropout=0).

    x:        (B, T, C) float32
    wq/wk/wv: (n_head, head_size, C)  per-head nn.Linear weights (PyTorch layout)
    wproj:    (C, C)                  output projection weight (PyTorch layout)
    """
    B, T, C = x.shape
    n_head, hs, c_in = wq.shape
    assert n_head * hs == C and c_in == C

    # Pad head_size to a 128-lane multiple: lane-aligned per-head blocks and
    # full-width MXU operands for the score / PV matmuls.
    hp = ((hs + 127) // 128) * 128
    hd = n_head * hp

    # Flash-style sequence tiling; short sequences use one full (8-padded) tile.
    if T >= seq_tile:
        tq = tk = seq_tile
    else:
        tq = tk = ((T + 7) // 8) * 8
    t_pad = ((T + tq - 1) // tq) * tq
    n_q, n_kv = t_pad // tq, t_pad // tk

    # bf16 input: halves the HBM->VMEM DMA.  Padded kv rows are removed by the
    # causal mask (col > row for every real row); padded q rows are sliced off.
    x_p = x if t_pad == T else jnp.pad(x, ((0, 0), (0, t_pad - T), (0, 0)))
    x_bf = x_p.astype(jnp.bfloat16)

    # Host-side weight prep (once, outside the hot path).
    def pack_heads(w):                                  # (n_head, hs, C) -> (C, hd)
        w_pad = jnp.pad(w, ((0, 0), (0, hp - hs), (0, 0)))
        return w_pad.transpose(2, 0, 1).reshape(C, hd)

    wqkv_t = jnp.concatenate(
        [pack_heads(wq * (hs ** -0.5)), pack_heads(wk), pack_heads(wv)],
        axis=1).astype(jnp.bfloat16)                    # (C, 3*hd), scale folded in

    wpt_pad = jnp.pad(
        wproj.T.reshape(n_head, hs, C), ((0, 0), (0, hp - hs), (0, 0))
    ).reshape(hd, C).astype(jnp.bfloat16)               # (hd, C), zero padded rows

    # Constant-block-index weight: single-buffer it (fallback if this JAX
    # version does not expose pipeline_mode / Buffered).
    try:
        wqkv_spec = pl.BlockSpec((C, 3 * hd), lambda b, ti: (0, 0),
                                 pipeline_mode=pl.Buffered(1))
    except (AttributeError, TypeError):
        wqkv_spec = pl.BlockSpec((C, 3 * hd), lambda b, ti: (0, 0))

    # ---- pass 1: fused QKV projection ------------------------------------
    q, k, v = pl.pallas_call(
        qkv_proj_kernel,
        out_shape=(jax.ShapeDtypeStruct((B, t_pad, hd), jnp.bfloat16),) * 3,
        grid_spec=pltpu.PrefetchScalarGridSpec(
            num_scalar_prefetch=0,
            grid=(B, n_q),
            in_specs=[
                pl.BlockSpec((1, tq, C), lambda b, ti: (b, ti, 0)),
                wqkv_spec,
            ],
            out_specs=[pl.BlockSpec((1, tq, hd), lambda b, ti: (b, ti, 0))] * 3,
        ),
        compiler_params=pltpu.CompilerParams(
            dimension_semantics=("parallel", "parallel"),
            vmem_limit_bytes=64 * 1024 * 1024),
        cost_estimate=pl.CostEstimate(
            flops=2 * B * t_pad * C * 3 * hd,
            transcendentals=0,
            bytes_accessed=2 * (B * t_pad * C + C * 3 * hd + 3 * B * t_pad * hd)),
    )(x_bf, wqkv_t)

    # ---- pass 2: flash attention + output projection ----------------------
    out = pl.pallas_call(
        functools.partial(flash_mha_kernel, tq=tq, tk=tk),
        out_shape=jax.ShapeDtypeStruct((B, t_pad, C), jnp.float32),
        grid_spec=pltpu.PrefetchScalarGridSpec(
            num_scalar_prefetch=0,
            grid=(B, n_q, n_head, n_kv),
            in_specs=[
                pl.BlockSpec((1, tq, hp), lambda b, qi, h, ki: (b, qi, h)),   # q
                pl.BlockSpec((1, tk, hp), lambda b, qi, h, ki: (b, ki, h)),   # k
                pl.BlockSpec((1, tk, hp), lambda b, qi, h, ki: (b, ki, h)),   # v
                pl.BlockSpec((hp, C), lambda b, qi, h, ki: (h, 0)),           # W_proj^T[h]
            ],
            out_specs=pl.BlockSpec((1, tq, C), lambda b, qi, h, ki: (b, qi, 0)),
            scratch_shapes=[
                pltpu.VMEM((tq, 1), jnp.float32),    # running max m
                pltpu.VMEM((tq, 1), jnp.float32),    # running sum l
                pltpu.VMEM((tq, hp), jnp.float32),   # unnormalized accumulator
            ],
        ),
        compiler_params=pltpu.CompilerParams(
            dimension_semantics=("parallel", "parallel", "arbitrary", "arbitrary"),
            vmem_limit_bytes=64 * 1024 * 1024),
        cost_estimate=pl.CostEstimate(
            flops=4 * B * n_head * t_pad * t_pad * hp + 2 * B * t_pad * hd * C,
            transcendentals=B * n_head * t_pad * t_pad,
            bytes_accessed=(2 * B * n_head * t_pad * hp * (1 + 2 * n_q)
                            + 2 * B * n_q * n_head * hp * C
                            + 4 * B * t_pad * C)),
    )(q, k, v, wpt_pad)

    return out if t_pad == T else out[:, :T, :]


def ref_mha(x, wq, wk, wv, wproj):
    """Pure-JAX f32 reference mirroring the PyTorch forward (bias=False, dropout=0)."""
    B, T, C = x.shape
    n_head, hs, _ = wq.shape
    mask = jnp.tril(jnp.ones((T, T), dtype=bool))
    outs = []
    for h in range(n_head):
        q = x @ wq[h].T
        k = x @ wk[h].T
        v = x @ wv[h].T
        s = (q @ jnp.swapaxes(k, -2, -1)) * (hs ** -0.5)
        s = jnp.where(mask, s, -jnp.inf)
        p = jax.nn.softmax(s, axis=-1)
        outs.append(p @ v)
    cat = jnp.concatenate(outs, axis=-1)
    return cat @ wproj.T


if __name__ == "__main__":
    # config: n_embd=32, n_head=4 (head_size=8), block_size=T=8, bias=False, dropout=0.0
    B, T, C, n_head = 2, 8, 32, 4
    hs = C // n_head

    key = jax.random.PRNGKey(0)
    kx, kq, kk, kvv, kp = jax.random.split(key, 5)

    x = jax.random.normal(kx, (B, T, C), dtype=jnp.float32)
    wq = 0.02 * jax.random.normal(kq, (n_head, hs, C), dtype=jnp.float32)
    wk = 0.02 * jax.random.normal(kk, (n_head, hs, C), dtype=jnp.float32)
    wv = 0.02 * jax.random.normal(kvv, (n_head, hs, C), dtype=jnp.float32)
    wproj = 0.02 * jax.random.normal(kp, (C, C), dtype=jnp.float32)

    out = multi_head_attention(x, wq, wk, wv, wproj)
    out = jax.block_until_ready(out)

    ref = ref_mha(x, wq, wk, wv, wproj)
    assert out.shape == (B, T, C)
    # Tolerance reflects bf16 MXU operands + approx reciprocal in the softmax.
    assert jnp.allclose(out, ref, atol=1e-2, rtol=1e-2), "mismatch vs reference"

    print("KERNEL_OK")
</pallas_src>

<mosaic_0001>
module attributes {stable_mosaic.version = 11 : i64} {
  func.func @qkv_proj_kernel(%arg0: i32, %arg1: i32, %arg2: memref<1x8x32xbf16, #tpu.memory_space<vmem>>, %arg3: memref<32x1536xbf16, #tpu.memory_space<vmem>>, %arg4: memref<1x8x512xbf16, #tpu.memory_space<vmem>>, %arg5: memref<1x8x512xbf16, #tpu.memory_space<vmem>>, %arg6: memref<1x8x512xbf16, #tpu.memory_space<vmem>>) attributes {dimension_semantics = [#tpu.dimension_semantics<parallel>, #tpu.dimension_semantics<parallel>], iteration_bounds = array<i64: 2, 1>, scalar_prefetch = 0 : i64, scratch_operands = 0 : i64, tpu.core_type = #tpu.core_type<tc>, window_params = [{transform_indices = @transform_0, window_bounds = array<i64: 1, 8, 32>}, {pipeline_mode = #tpu.pipeline_mode<synchronous>, transform_indices = @transform_1, window_bounds = array<i64: 32, 1536>}, {transform_indices = @transform_2, window_bounds = array<i64: 1, 8, 512>}, {transform_indices = @transform_3, window_bounds = array<i64: 1, 8, 512>}, {transform_indices = @transform_4, window_bounds = array<i64: 1, 8, 512>}]} {
    %c0 = arith.constant 0 : index
    %c0_0 = arith.constant 0 : index
    %c0_1 = arith.constant 0 : index
    %0 = vector.load %arg2[%c0, %c0_0, %c0_1] : memref<1x8x32xbf16, #tpu.memory_space<vmem>>, vector<1x8x32xbf16>
    %1 = vector.shape_cast %0 : vector<1x8x32xbf16> to vector<8x32xbf16>
    %c0_2 = arith.constant 0 : index
    %c0_3 = arith.constant 0 : index
    %2 = vector.load %arg3[%c0_2, %c0_3] : memref<32x1536xbf16, #tpu.memory_space<vmem>>, vector<32x1536xbf16>
    %cst = arith.constant dense<0.000000e+00> : vector<8x1536xf32>
    %3 = tpu.matmul %1, %2, %cst {dimension_numbers = #tpu.dot_dimension_numbers<[1], [0], [0], [1], [0, 0, 1, 1], [], []>} : vector<8x32xbf16>, vector<32x1536xbf16>, vector<8x1536xf32> -> vector<8x1536xf32>
    %4 = vector.extract_strided_slice %3 {offsets = [0, 0], sizes = [8, 512], strides = [1, 1]} : vector<8x1536xf32> to vector<8x512xf32>
    %5 = arith.truncf %4 : vector<8x512xf32> to vector<8x512xbf16>
    %c0_4 = arith.constant 0 : index
    %c0_5 = arith.constant 0 : index
    %c0_6 = arith.constant 0 : index
    %6 = vector.load %arg4[%c0_4, %c0_5, %c0_6] : memref<1x8x512xbf16, #tpu.memory_space<vmem>>, vector<1x8x512xbf16>
    %7 = vector.shape_cast %6 : vector<1x8x512xbf16> to vector<8x512xbf16>
    %8 = vector.shape_cast %5 : vector<8x512xbf16> to vector<1x8x512xbf16>
    tpu.vector_store %arg4[%c0_4, %c0_5, %c0_6], %8 {strides = array<i32>} : memref<1x8x512xbf16, #tpu.memory_space<vmem>>, vector<1x8x512xbf16>,
    %9 = vector.extract_strided_slice %3 {offsets = [0, 512], sizes = [8, 512], strides = [1, 1]} : vector<8x1536xf32> to vector<8x512xf32>
    %10 = arith.truncf %9 : vector<8x512xf32> to vector<8x512xbf16>
    %c0_7 = arith.constant 0 : index
    %c0_8 = arith.constant 0 : index
    %c0_9 = arith.constant 0 : index
    %11 = vector.load %arg5[%c0_7, %c0_8, %c0_9] : memref<1x8x512xbf16, #tpu.memory_space<vmem>>, vector<1x8x512xbf16>
    %12 = vector.shape_cast %11 : vector<1x8x512xbf16> to vector<8x512xbf16>
    %13 = vector.shape_cast %10 : vector<8x512xbf16> to vector<1x8x512xbf16>
    tpu.vector_store %arg5[%c0_7, %c0_8, %c0_9], %13 {strides = array<i32>} : memref<1x8x512xbf16, #tpu.memory_space<vmem>>, vector<1x8x512xbf16>,
    %14 = vector.extract_strided_slice %3 {offsets = [0, 1024], sizes = [8, 512], strides = [1, 1]} : vector<8x1536xf32> to vector<8x512xf32>
    %15 = arith.truncf %14 : vector<8x512xf32> to vector<8x512xbf16>
    %c0_10 = arith.constant 0 : index
    %c0_11 = arith.constant 0 : index
    %c0_12 = arith.constant 0 : index
    %16 = vector.load %arg6[%c0_10, %c0_11, %c0_12] : memref<1x8x512xbf16, #tpu.memory_space<vmem>>, vector<1x8x512xbf16>
    %17 = vector.shape_cast %16 : vector<1x8x512xbf16> to vector<8x512xbf16>
    %18 = vector.shape_cast %15 : vector<8x512xbf16> to vector<1x8x512xbf16>
    tpu.vector_store %arg6[%c0_10, %c0_11, %c0_12], %18 {strides = array<i32>} : memref<1x8x512xbf16, #tpu.memory_space<vmem>>, vector<1x8x512xbf16>,
    return
  }
  func.func @transform_0(%arg0: i32, %arg1: i32) -> (i32, i32, i32) {
    %c0_i32 = arith.constant 0 : i32
    %c0_i32_0 = arith.constant 0 : i32
    return %arg0, %arg1, %c0_i32 : i32, i32, i32
  }
  func.func @transform_1(%arg0: i32, %arg1: i32) -> (i32, i32) {
    %c0_i32 = arith.constant 0 : i32
    %c0_i32_0 = arith.constant 0 : i32
    %c0_i32_1 = arith.constant 0 : i32
    return %c0_i32, %c0_i32_0 : i32, i32
  }
  func.func @transform_2(%arg0: i32, %arg1: i32) -> (i32, i32, i32) {
    %c0_i32 = arith.constant 0 : i32
    %c0_i32_0 = arith.constant 0 : i32
    return %arg0, %arg1, %c0_i32 : i32, i32, i32
  }
  func.func @transform_3(%arg0: i32, %arg1: i32) -> (i32, i32, i32) {
    %c0_i32 = arith.constant 0 : i32
    %c0_i32_0 = arith.constant 0 : i32
    return %arg0, %arg1, %c0_i32 : i32, i32, i32
  }
  func.func @transform_4(%arg0: i32, %arg1: i32) -> (i32, i32, i32) {
    %c0_i32 = arith.constant 0 : i32
    %c0_i32_0 = arith.constant 0 : i32
    return %arg0, %arg1, %c0_i32 : i32, i32, i32
  }
}

</mosaic_0001>

<llo_original>
// kernel: tpu_custom_call.1
$region0: #{tpu_custom_call.1}
  #allocation0 [shape = 'u32[]', space=smem, size = 0x4, offset = 0x4, fixed_abs, tag = 'smem constant byte address 0x4 - core index']
  #allocation1 [shape = 'u32[72,128]{1,0:T(1,128)}', space=vmem, size = 0x9000, scoped, tag = 'internal scratch']
  %s0 = inlined_call_operand.hbm [shape: bf16[2,8,32], index: 0, kind: input, shape index: {}]
  %s1 = inlined_call_operand.hbm [shape: bf16[32,1536], index: 1, kind: input, shape index: {}]
  %s2 = inlined_call_operand.hbm [shape: bf16[2,8,512], index: 2, kind: output, shape index: {0}]
  %s3 = inlined_call_operand.hbm [shape: bf16[2,8,512], index: 3, kind: output, shape index: {1}]
  %s4 = inlined_call_operand.hbm [shape: bf16[2,8,512], index: 4, kind: output, shape index: {2}]
  %5 = xla_tuple %s2, %s3, %s4
  %s6 = sld [smem:[#allocation0]]
  $region65: #{tpu_custom_call.1} parent=0
    _
  %s8 = ssub.s32 1, %s6
  %s9 = scalar_select 0, %s8, %s6
  $region1: #{tpu_custom_call.1} parent=0
    #allocation2 [shape = 'u8[4096]{0}', space=vmem, size = 0x1000, scoped, tag = 'input window, operand 0']
    #allocation3 [shape = 's32[2]{0}', space=sflag, size = 0x8, scoped, tag = 'scoped memory for tpu_custom_call.1']
    #allocation4 [shape = 's32[2]{0}', space=sflag, size = 0x8, scoped, tag = 'scoped memory for tpu_custom_call.1']
    #allocation5 [shape = 'u8[98304]{0}', space=vmem, size = 0x18000, scoped, tag = 'input window, operand 1, single buffered']
    #allocation6 [shape = 's32[1]{0}', space=sflag, size = 0x4, scoped, tag = 'scoped memory for tpu_custom_call.1']
    #allocation7 [shape = 'u8[16384]{0}', space=vmem, size = 0x4000, scoped, tag = 'output window, operand 0']
    #allocation8 [shape = 'u8[16384]{0}', space=vmem, size = 0x4000, scoped, tag = 'output window, operand 1']
    #allocation9 [shape = 's32[2]{0}', space=sflag, size = 0x8, scoped, tag = 'scoped memory for tpu_custom_call.1']
    #allocation10 [shape = 'u8[16384]{0}', space=vmem, size = 0x4000, scoped, tag = 'output window, operand 2']
    %10 = vsyncpa [#allocation3], 0
    %s11 = scalar_lea.sflag [#allocation3], 1
    %12 = vsyncpa %s11, 0
    %13 = vsyncpa [#allocation6], 0
    %14 = vsyncpa [#allocation4], 0
    %s15 = scalar_lea.sflag [#allocation4], 1
    %16 = vsyncpa %s15, 0
    %17 = vsyncpa [#allocation9], 0
    %s18 = scalar_lea.sflag [#allocation9], 1
    %19 = vsyncpa %s18, 0
    loop: start=0, step=1, limit=4
    $region2: #{tpu_custom_call.1} parent=1 // loop_pre_header
      _
    $region3: #{tpu_custom_call.1} parent=1 // loop_header
      %s21 = sphi 0, %s25
      %p22 = scmp.ge.s32.totalorder %s21, 4
      %s28 = sphi 0, %s40
      %s29 = sphi 0, %s36
      %s30 = sphi 0, %s28
      %s31 = sphi 0, %s29
      %s32 = sphi 0, %s30
      %s33 = sphi 0, %s31
      %s45 = sphi 0, %s47
      %s48 = sphi 0, %s45
      %s49 = sphi 0, %s48
      %s65 = sphi 0, %s49
      %s69 = sphi 0, %s69
      %s71 = sphi 0, %s69
      %s72 = sphi 0, %s71
      %s86 = sphi 0, %s72
      %s94 = sphi 0, %s96
      %s97 = sphi 0, %s94
      %s98 = sphi 0, %s97
      %s114 = sphi 0, %s98
      %s122 = sphi 0, %s124
      %s125 = sphi 0, %s122
      %s126 = sphi 0, %s125
      %s142 = sphi 0, %s126
      %s150 = sphi 0, %s152
      %s153 = sphi 0, %s150
      %s154 = sphi 0, %s153
      %s170 = sphi 0, %s154
    $region4: #{tpu_custom_call.1} parent=1 // loop_header_branch
      %24 = sbr.rel (%p22) target = $region8
    $region5: #{tpu_custom_call.1} parent=1 // loop_body
      %s26 = ssub.s32 %s21, 1
      %s27 = ssub.s32 %s21, 2
      %s34 = sadd.s32 1, %s29
      %p35 = scmp.ge.s32.totalorder %s34, 1
      %s36 = scalar_select %p35, 0, %s34
      %s37 = sadd.s32 1, %s28
      %s38 = scalar_select %p35, %s37, %s28
      %p39 = scmp.ge.s32.totalorder %s38, 2
      %s40 = scalar_select %p39, 0, %s38
      %s41 = ssub.s32 %s28, %s40
      %s42 = ssub.s32 %s29, %s36
      %s43 = sor.u32 %s41, %s42
      %p44 = scmp.eq.s32.totalorder %s43, 0
      %s46 = sadd.s32 %s45, 1
      %s47 = scalar_select %p44, %s45, %s46
      %p50 = pneg %p44
      %p51 = scmp.eq.s32.totalorder %s21, 1
      %p52 = por %p50, %p51
      %p53 = scmp.ne.s32.totalorder %s45, %s48
      %p54 = scmp.eq.s32.totalorder %s21, 0
      %p55 = por %p53, %p54
      %p56 = scmp.ne.s32.totalorder %s45, %s48
      %p57 = scmp.eq.s32.totalorder %s26, 1
      %p58 = por %p56, %p57
      %p59 = scmp.ne.s32.totalorder %s48, %s49
      %p60 = scmp.eq.s32.totalorder %s26, 0
      %p61 = por %p59, %p60
      %p62 = scmp.ne.s32.totalorder %s48, %s49
      %p63 = scmp.eq.s32.totalorder %s27, 1
      %p64 = por %p62, %p63
      %p66 = scmp.ne.s32.totalorder %s49, %s65
      %p67 = scmp.eq.s32.totalorder %s27, 0
      %p68 = por %p66, %p67
      %s70 = sadd.s32 %s69, 1
      %p73 = scmp.eq.s32.totalorder %s21, 1
      %p74 = scmp.ne.s32.totalorder %s69, %s71
      %p75 = scmp.eq.s32.totalorder %s21, 0
      %p76 = por %p74, %p75
      %p77 = scmp.ne.s32.totalorder %s69, %s71
      %p78 = scmp.eq.s32.totalorder %s26, 1
      %p79 = por %p77, %p78
      %p80 = scmp.ne.s32.totalorder %s71, %s72
      %p81 = scmp.eq.s32.totalorder %s26, 0
      %p82 = por %p80, %p81
      %p83 = scmp.ne.s32.totalorder %s71, %s72
      %p84 = scmp.eq.s32.totalorder %s27, 1
      %p85 = por %p83, %p84
      %p87 = scmp.ne.s32.totalorder %s72, %s86
      %p88 = scmp.eq.s32.totalorder %s27, 0
      %p89 = por %p87, %p88
      %s90 = ssub.s32 %s28, %s40
      %s91 = ssub.s32 %s29, %s36
      %s92 = sor.u32 %s90, %s91
      %p93 = scmp.eq.s32.totalorder %s92, 0
      %s95 = sadd.s32 %s94, 1
      %s96 = scalar_select %p93, %s94, %s95
      %p99 = pneg %p93
      %p100 = scmp.eq.s32.totalorder %s21, 1
      %p101 = por %p99, %p100
      %p102 = scmp.ne.s32.totalorder %s94, %s97
      %p103 = scmp.eq.s32.totalorder %s21, 0
      %p104 = por %p102, %p103
      %p105 = scmp.ne.s32.totalorder %s94, %s97
      %p106 = scmp.eq.s32.totalorder %s26, 1
      %p107 = por %p105, %p106
      %p108 = scmp.ne.s32.totalorder %s97, %s98
      %p109 = scmp.eq.s32.totalorder %s26, 0
      %p110 = por %p108, %p109
      %p111 = scmp.ne.s32.totalorder %s97, %s98
      %p112 = scmp.eq.s32.totalorder %s27, 1
      %p113 = por %p111, %p112
      %p115 = scmp.ne.s32.totalorder %s98, %s114
      %p116 = scmp.eq.s32.totalorder %s27, 0
      %p117 = por %p115, %p116
      %s118 = ssub.s32 %s28, %s40
      %s119 = ssub.s32 %s29, %s36
      %s120 = sor.u32 %s118, %s119
      %p121 = scmp.eq.s32.totalorder %s120, 0
      %s123 = sadd.s32 %s122, 1
      %s124 = scalar_select %p121, %s122, %s123
      %p127 = pneg %p121
      %p128 = scmp.eq.s32.totalorder %s21, 1
      %p129 = por %p127, %p128
      %p130 = scmp.ne.s32.totalorder %s122, %s125
      %p131 = scmp.eq.s32.totalorder %s21, 0
      %p132 = por %p130, %p131
      %p133 = scmp.ne.s32.totalorder %s122, %s125
      %p134 = scmp.eq.s32.totalorder %s26, 1
      %p135 = por %p133, %p134
      %p136 = scmp.ne.s32.totalorder %s125, %s126
      %p137 = scmp.eq.s32.totalorder %s26, 0
      %p138 = por %p136, %p137
      %p139 = scmp.ne.s32.totalorder %s125, %s126
      %p140 = scmp.eq.s32.totalorder %s27, 1
      %p141 = por %p139, %p140
      %p143 = scmp.ne.s32.totalorder %s126, %s142
      %p144 = scmp.eq.s32.totalorder %s27, 0
      %p145 = por %p143, %p144
      %s146 = ssub.s32 %s28, %s40
      %s147 = ssub.s32 %s29, %s36
      %s148 = sor.u32 %s146, %s147
      %p149 = scmp.eq.s32.totalorder %s148, 0
      %s151 = sadd.s32 %s150, 1
      %s152 = scalar_select %p149, %s150, %s151
      %p155 = pneg %p149
      %p156 = scmp.eq.s32.totalorder %s21, 1
      %p157 = por %p155, %p156
      %p158 = scmp.ne.s32.totalorder %s150, %s153
      %p159 = scmp.eq.s32.totalorder %s21, 0
      %p160 = por %p158, %p159
      %p161 = scmp.ne.s32.totalorder %s150, %s153
      %p162 = scmp.eq.s32.totalorder %s26, 1
      %p163 = por %p161, %p162
      %p164 = scmp.ne.s32.totalorder %s153, %s154
      %p165 = scmp.eq.s32.totalorder %s26, 0
      %p166 = por %p164, %p165
      %p167 = scmp.ne.s32.totalorder %s153, %s154
      %p168 = scmp.eq.s32.totalorder %s27, 1
      %p169 = por %p167, %p168
      %p171 = scmp.ne.s32.totalorder %s154, %s170
      %p172 = scmp.eq.s32.totalorder %s27, 0
      %p173 = por %p171, %p172
      %p174 = scmp.le.s32.totalorder 1, %s21
      %p175 = scmp.lt.s32.totalorder %s21, 3
      %p176 = pnand %p174, %p175
      %p177 = pneg %p176
      // Predicated region
      $region9: #{tpu_custom_call.1} parent=5 // pred_check
        _
      $region10: #{tpu_custom_call.1} parent=5 // pred_check_branch
        %179 = sbr.rel (%p176) target = $region12
      $region11: #{tpu_custom_call.1} parent=5 // pred_region
        %s180 = ssub.s32 %s21, 1
        // Predicated region
        $region13: #{tpu_custom_call.1} parent=11 // pred_check
          %p181 = pneg %p82
        $region14: #{tpu_custom_call.1} parent=11 // pred_check_branch
          %183 = sbr.rel (%p181) target = $region16
        $region15: #{tpu_custom_call.1} parent=11 // pred_region
          %185 = vsyncadd [#allocation6], 0
          %s186 = sshll.u32 %s1, 4
          %s187 = int_to_ptr.hbm [resolvable:$true] %s186
          %s188 = sshll.u32 [#allocation5], 4
          %s189 = int_to_ptr.vmem [resolvable:$true] %s188
          %194 = dma.hbm_to_vmem [thread:$0]  %s187, 3072, %s189, [#allocation6], 768, 768, 48
        $region16: #{tpu_custom_call.1} parent=11 // pred_fallthru
          _
      $region12: #{tpu_custom_call.1} parent=5 // pred_fallthru
        _
      %p195 = scmp.lt.s32.totalorder %s21, 2
      // Predicated region
      $region17: #{tpu_custom_call.1} parent=5 // pred_check
        %p196 = pneg %p195
      $region18: #{tpu_custom_call.1} parent=5 // pred_check_branch
        %198 = sbr.rel (%p196) target = $region20
      $region19: #{tpu_custom_call.1} parent=5 // pred_region
        // Predicated region
        $region21: #{tpu_custom_call.1} parent=19 // pred_check
          %p199 = pneg %p55
        $region22: #{tpu_custom_call.1} parent=19 // pred_check_branch
          %201 = sbr.rel (%p199) target = $region24
        $region23: #{tpu_custom_call.1} parent=19 // pred_region
          %s202 = sand.u32 %s45, 1
          %s203 = scalar_lea.sflag [#allocation3], %s202
          %s204 = sand.u32 %s45, 1
          %s205 = smul.addr %s204, 4
          %s206 = scalar_lea.vmem [#allocation2], %s205
          %208 = vsyncadd %s203, 0
          %s209 = sadd.s32 %s29, %s28
          %s210 = smul.addr %s209, 4
          %s211 = scalar_lea.hbm %s0, %s210
          %s213 = sshll.u32 %s211, 4
          %s214 = int_to_ptr.hbm [resolvable:$true] %s213
          %s215 = sshll.u32 %s206, 4
          %s216 = int_to_ptr.vmem [resolvable:$true] %s215
          %218 = dma.hbm_to_vmem [thread:$0]  %s214, 64, %s216, %s203
        $region24: #{tpu_custom_call.1} parent=19 // pred_fallthru
          _
      $region20: #{tpu_custom_call.1} parent=5 // pred_fallthru
        _
      %p219 = scmp.le.s32.totalorder 1, %s21
      %p220 = scmp.lt.s32.totalorder %s21, 3
      %p221 = pnand %p219, %p220
      %p222 = pneg %p221
      // Predicated region
      $region25: #{tpu_custom_call.1} parent=5 // pred_check
        _
      $region26: #{tpu_custom_call.1} parent=5 // pred_check_branch
        %224 = sbr.rel (%p221) target = $region28
      $region27: #{tpu_custom_call.1} parent=5 // pred_region
        %s225 = ssub.s32 %s21, 1
        %s226 = sand.u32 %s48, 1
        %s227 = scalar_lea.sflag [#allocation3], %s226
        %s228 = sand.u32 %s48, 1
        %s229 = smul.addr %s228, 4
        %s230 = scalar_lea.vmem [#allocation2], %s229
        // Predicated region
        $region29: #{tpu_custom_call.1} parent=27 // pred_check
          %p231 = pneg %p61
        $region30: #{tpu_custom_call.1} parent=27 // pred_check_branch
          %233 = sbr.rel (%p231) target = $region32
        $region31: #{tpu_custom_call.1} parent=27 // pred_region
          %235 = dma.done %s227, 64
        $region32: #{tpu_custom_call.1} parent=27 // pred_fallthru
          _
        // Predicated region
        $region33: #{tpu_custom_call.1} parent=27 // pred_check
          %p236 = pneg %p82
        $region34: #{tpu_custom_call.1} parent=27 // pred_check_branch
          %238 = sbr.rel (%p236) target = $region36
        $region35: #{tpu_custom_call.1} parent=27 // pred_region
          %240 = dma.done [#allocation6], 3072
        $region36: #{tpu_custom_call.1} parent=27 // pred_fallthru
          _
        %s241 = sand.u32 %s48, 1
        %s242 = scalar_lea.sflag [#allocation3], %s241
        %s243 = sand.u32 %s48, 1
        %s244 = smul.addr %s243, 4
        %s245 = scalar_lea.vmem [#allocation2], %s244
        %p246 = pneg %p61
        %p247 = pneg %p58
        %p248 = pneg %p82
        %p249 = pneg %p79
        %p250 = pneg %p110
        %p251 = pneg %p107
        %s252 = sand.u32 %s97, 1
        %s253 = scalar_lea.sflag [#allocation4], %s252
        %s254 = sand.u32 %s97, 1
        %s255 = smul.addr %s254, 16
        %s256 = scalar_lea.vmem [#allocation7], %s255
        %p257 = pneg %p138
        %p258 = pneg %p135
        %s259 = sand.u32 %s26, 1
        %s260 = scalar_lea.sflag [#allocation9], %s259
        %s261 = sand.u32 %s125, 1
        %s262 = smul.addr %s261, 16
        %s263 = scalar_lea.vmem [#allocation8], %s262
        %p264 = pneg %p166
        %p265 = pneg %p163
        %s266 = sand.u32 %s26, 1
        %s267 = scalar_lea.sflag [#allocation9], %s266
        %s268 = sand.u32 %s153, 1
        %s269 = smul.addr %s268, 16
        %s270 = scalar_lea.vmem [#allocation10], %s269
        %v272 = vld [vmem:[%s230] sm:$0xf]
        %v273 = vld [vmem:[#allocation5] sm:$0xff]
        %v274 = vld [vmem:[#allocation5 + $0x8] sm:$0xff]
        %v275 = vld [vmem:[#allocation5 + $0x10] sm:$0xff]
        %v276 = vld [vmem:[#allocation5 + $0x18] sm:$0xff]
        %v277 = vld [vmem:[#allocation5 + $0x20] sm:$0xff]
        %v278 = vld [vmem:[#allocation5 + $0x28] sm:$0xff]
        %v279 = vld [vmem:[#allocation5 + $0x30] sm:$0xff]
        %v280 = vld [vmem:[#allocation5 + $0x38] sm:$0xff]
        %v281 = vld [vmem:[#allocation5 + $0x40] sm:$0xff]
        %v282 = vld [vmem:[#allocation5 + $0x48] sm:$0xff]
        %v283 = vld [vmem:[#allocation5 + $0x50] sm:$0xff]
        %v284 = vld [vmem:[#allocation5 + $0x58] sm:$0xff]
        %v285 = vld [vmem:[#allocation5 + $0x60] sm:$0xff]
        %v286 = vld [vmem:[#allocation5 + $0x68] sm:$0xff]
        %v287 = vld [vmem:[#allocation5 + $0x70] sm:$0xff]
        %v288 = vld [vmem:[#allocation5 + $0x78] sm:$0xff]
        %v289 = vld [vmem:[#allocation5 + $0x80] sm:$0xff]
        %v290 = vld [vmem:[#allocation5 + $0x88] sm:$0xff]
        %v291 = vld [vmem:[#allocation5 + $0x90] sm:$0xff]
        %v292 = vld [vmem:[#allocation5 + $0x98] sm:$0xff]
        %v293 = vld [vmem:[#allocation5 + $0xa0] sm:$0xff]
        %v294 = vld [vmem:[#allocation5 + $0xa8] sm:$0xff]
        %v295 = vld [vmem:[#allocation5 + $0xb0] sm:$0xff]
        %v296 = vld [vmem:[#allocation5 + $0xb8] sm:$0xff]
        %v321 = vunpack.c.l.b16 %v273
        %v322 = vunpack.c.h.b16 %v273
        %v323 = vunpack.c.l.b16 %v274
        %v324 = vunpack.c.h.b16 %v274
        %v325 = vunpack.c.l.b16 %v275
        %v326 = vunpack.c.h.b16 %v275
        %v327 = vunpack.c.l.b16 %v276
        %v328 = vunpack.c.h.b16 %v276
        %v329 = vunpack.c.l.b16 %v277
        %v330 = vunpack.c.h.b16 %v277
        %v331 = vunpack.c.l.b16 %v278
        %v332 = vunpack.c.h.b16 %v278
        %v333 = vunpack.c.l.b16 %v279
        %v334 = vunpack.c.h.b16 %v279
        %v335 = vunpack.c.l.b16 %v280
        %v336 = vunpack.c.h.b16 %v280
        %v337 = vunpack.c.l.b16 %v281
        %v338 = vunpack.c.h.b16 %v281
        %v339 = vunpack.c.l.b16 %v282
        %v340 = vunpack.c.h.b16 %v282
        %v341 = vunpack.c.l.b16 %v283
        %v342 = vunpack.c.h.b16 %v283
        %v343 = vunpack.c.l.b16 %v284
        %v344 = vunpack.c.h.b16 %v284
        %v345 = vunpack.c.l.b16 %v285
        %v346 = vunpack.c.h.b16 %v285
        %v347 = vunpack.c.l.b16 %v286
        %v348 = vunpack.c.h.b16 %v286
        %v349 = vunpack.c.l.b16 %v287
        %v350 = vunpack.c.h.b16 %v287
        %v351 = vunpack.c.l.b16 %v288
        %v352 = vunpack.c.h.b16 %v288
        %v353 = vunpack.c.l.b16 %v289
        %v354 = vunpack.c.h.b16 %v289
        %v355 = vunpack.c.l.b16 %v290
        %v356 = vunpack.c.h.b16 %v290
        %v357 = vunpack.c.l.b16 %v291
        %v358 = vunpack.c.h.b16 %v291
        %v359 = vunpack.c.l.b16 %v292
        %v360 = vunpack.c.h.b16 %v292
        %v361 = vunpack.c.l.b16 %v293
        %v362 = vunpack.c.h.b16 %v293
        %v363 = vunpack.c.l.b16 %v294
        %v364 = vunpack.c.h.b16 %v294
        %v365 = vunpack.c.l.b16 %v295
        %v366 = vunpack.c.h.b16 %v295
        %v367 = vunpack.c.l.b16 %v296
        %v368 = vunpack.c.h.b16 %v296
        %v369 = vpack.c.b16 %v333, %v321
        %v370 = vpack.c.b16 %v334, %v322
        %v371 = vpack.c.b16 %v335, %v323
        %v372 = vpack.c.b16 %v336, %v324
        %v373 = vpack.c.b16 %v337, %v325
        %v374 = vpack.c.b16 %v338, %v326
        %v375 = vpack.c.b16 %v339, %v327
        %v376 = vpack.c.b16 %v340, %v328
        %v377 = vpack.c.b16 %v341, %v329
        %v378 = vpack.c.b16 %v342, %v330
        %v379 = vpack.c.b16 %v343, %v331
        %v380 = vpack.c.b16 %v344, %v332
        %v381 = vpack.c.b16 %v357, %v345
        %v382 = vpack.c.b16 %v358, %v346
        %v383 = vpack.c.b16 %v359, %v347
        %v384 = vpack.c.b16 %v360, %v348
        %v385 = vpack.c.b16 %v361, %v349
        %v386 = vpack.c.b16 %v362, %v350
        %v387 = vpack.c.b16 %v363, %v351
        %v388 = vpack.c.b16 %v364, %v352
        %v389 = vpack.c.b16 %v365, %v353
        %v390 = vpack.c.b16 %v366, %v354
        %v391 = vpack.c.b16 %v367, %v355
        %v392 = vpack.c.b16 %v368, %v356
        %vm417 = vcmask 261120
        %v419 = vsel %vm417, %v272, 0
        %421 = vmatpush.bf16.msra.mxu0 0
        %422 = vmatpush.bf16.msra.mxu0 0
        %423 = vmatpush.bf16.msra.mxu0 0
        %424 = vmatpush.bf16.msra.mxu0 0
        %425 = vmatpush.bf16.msra.mxu0 0
        %426 = vmatpush.bf16.msra.mxu0 0
        %427 = vmatpush.bf16.msra.mxu0 %v381
        %428 = vmatpush.bf16.msra.mxu0 %v369
        %429 = vmatmul.bf16.gmra.mxu0 %v419
        %v430 = vpop.f32.mrf.mxu0
        %v431 = vadd.f32 0.0, %v430
        %v432 = vpop.f32.mrf.mxu0
        %433 = vdwg.mxu0
        %434 = vmatpush.bf16.msra.mxu0 0
        %435 = vmatpush.bf16.msra.mxu0 0
        %436 = vmatpush.bf16.msra.mxu0 0
        %437 = vmatpush.bf16.msra.mxu0 0
        %438 = vmatpush.bf16.msra.mxu0 0
        %439 = vmatpush.bf16.msra.mxu0 0
        %440 = vmatpush.bf16.msra.mxu0 %v382
        %441 = vmatpush.bf16.msra.mxu0 %v370
        %442 = vmatmul.bf16.gmra.mxu0 %v419
        %v443 = vpop.f32.mrf.mxu0
        %v444 = vadd.f32 0.0, %v443
        %v445 = vpop.f32.mrf.mxu0
        %446 = vdwg.mxu0
        %447 = vmatpush.bf16.msra.mxu0 0
        %448 = vmatpush.bf16.msra.mxu0 0
        %449 = vmatpush.bf16.msra.mxu0 0
        %450 = vmatpush.bf16.msra.mxu0 0
        %451 = vmatpush.bf16.msra.mxu0 0
        %452 = vmatpush.bf16.msra.mxu0 0
        %453 = vmatpush.bf16.msra.mxu0 %v383
        %454 = vmatpush.bf16.msra.mxu0 %v371
        %455 = vmatmul.bf16.gmra.mxu0 %v419
        %v456 = vpop.f32.mrf.mxu0
        %v457 = vadd.f32 0.0, %v456
        %v458 = vpop.f32.mrf.mxu0
        %459 = vdwg.mxu0
        %460 = vmatpush.bf16.msra.mxu0 0
        %461 = vmatpush.bf16.msra.mxu0 0
        %462 = vmatpush.bf16.msra.mxu0 0
        %463 = vmatpush.bf16.msra.mxu0 0
        %464 = vmatpush.bf16.msra.mxu0 0
        %465 = vmatpush.bf16.msra.mxu0 0
        %466 = vmatpush.bf16.msra.mxu0 %v384
        %467 = vmatpush.bf16.msra.mxu0 %v372
        %468 = vmatmul.bf16.gmra.mxu0 %v419
        %v469 = vpop.f32.mrf.mxu0
        %v470 = vadd.f32 0.0, %v469
        %v471 = vpop.f32.mrf.mxu0
        %472 = vdwg.mxu0
        %473 = vmatpush.bf16.msra.mxu0 0
        %474 = vmatpush.bf16.msra.mxu0 0
        %475 = vmatpush.bf16.msra.mxu0 0
        %476 = vmatpush.bf16.msra.mxu0 0
        %477 = vmatpush.bf16.msra.mxu0 0
        %478 = vmatpush.bf16.msra.mxu0 0
        %479 = vmatpush.bf16.msra.mxu0 %v385
        %480 = vmatpush.bf16.msra.mxu0 %v373
        %481 = vmatmul.bf16.gmra.mxu0 %v419
        %v482 = vpop.f32.mrf.mxu0
        %v483 = vadd.f32 0.0, %v482
        %v484 = vpop.f32.mrf.mxu0
        %485 = vdwg.mxu0
        %486 = vmatpush.bf16.msra.mxu0 0
        %487 = vmatpush.bf16.msra.mxu0 0
        %488 = vmatpush.bf16.msra.mxu0 0
        %489 = vmatpush.bf16.msra.mxu0 0
        %490 = vmatpush.bf16.msra.mxu0 0
        %491 = vmatpush.bf16.msra.mxu0 0
        %492 = vmatpush.bf16.msra.mxu0 %v386
        %493 = vmatpush.bf16.msra.mxu0 %v374
        %494 = vmatmul.bf16.gmra.mxu0 %v419
        %v495 = vpop.f32.mrf.mxu0
        %v496 = vadd.f32 0.0, %v495
        %v497 = vpop.f32.mrf.mxu0
        %498 = vdwg.mxu0
        %499 = vmatpush.bf16.msra.mxu0 0
        %500 = vmatpush.bf16.msra.mxu0 0
        %501 = vmatpush.bf16.msra.mxu0 0
        %502 = vmatpush.bf16.msra.mxu0 0
        %503 = vmatpush.bf16.msra.mxu0 0
        %504 = vmatpush.bf16.msra.mxu0 0
        %505 = vmatpush.bf16.msra.mxu0 %v387
        %506 = vmatpush.bf16.msra.mxu0 %v375
        %507 = vmatmul.bf16.gmra.mxu0 %v419
        %v508 = vpop.f32.mrf.mxu0
        %v509 = vadd.f32 0.0, %v508
        %v510 = vpop.f32.mrf.mxu0
        %511 = vdwg.mxu0
        %512 = vmatpush.bf16.msra.mxu0 0
        %513 = vmatpush.bf16.msra.mxu0 0
        %514 = vmatpush.bf16.msra.mxu0 0
        %515 = vmatpush.bf16.msra.mxu0 0
        %516 = vmatpush.bf16.msra.mxu0 0
        %517 = vmatpush.bf16.msra.mxu0 0
        %518 = vmatpush.bf16.msra.mxu0 %v388
        %519 = vmatpush.bf16.msra.mxu0 %v376
        %520 = vmatmul.bf16.gmra.mxu0 %v419
        %v521 = vpop.f32.mrf.mxu0
        %v522 = vadd.f32 0.0, %v521
        %v523 = vpop.f32.mrf.mxu0
        %524 = vdwg.mxu0
        %525 = vmatpush.bf16.msra.mxu0 0
        %526 = vmatpush.bf16.msra.mxu0 0
        %527 = vmatpush.bf16.msra.mxu0 0
        %528 = vmatpush.bf16.msra.mxu0 0
        %529 = vmatpush.bf16.msra.mxu0 0
        %530 = vmatpush.bf16.msra.mxu0 0
        %531 = vmatpush.bf16.msra.mxu0 %v389
        %532 = vmatpush.bf16.msra.mxu0 %v377
        %533 = vmatmul.bf16.gmra.mxu0 %v419
        %v534 = vpop.f32.mrf.mxu0
        %v535 = vadd.f32 0.0, %v534
        %v536 = vpop.f32.mrf.mxu0
        %537 = vdwg.mxu0
        %538 = vmatpush.bf16.msra.mxu0 0
        %539 = vmatpush.bf16.msra.mxu0 0
        %540 = vmatpush.bf16.msra.mxu0 0
        %541 = vmatpush.bf16.msra.mxu0 0
        %542 = vmatpush.bf16.msra.mxu0 0
        %543 = vmatpush.bf16.msra.mxu0 0
        %544 = vmatpush.bf16.msra.mxu0 %v390
        %545 = vmatpush.bf16.msra.mxu0 %v378
        %546 = vmatmul.bf16.gmra.mxu0 %v419
        %v547 = vpop.f32.mrf.mxu0
        %v548 = vadd.f32 0.0, %v547
        %v549 = vpop.f32.mrf.mxu0
        %550 = vdwg.mxu0
        %551 = vmatpush.bf16.msra.mxu0 0
        %552 = vmatpush.bf16.msra.mxu0 0
        %553 = vmatpush.bf16.msra.mxu0 0
        %554 = vmatpush.bf16.msra.mxu0 0
        %555 = vmatpush.bf16.msra.mxu0 0
        %556 = vmatpush.bf16.msra.mxu0 0
        %557 = vmatpush.bf16.msra.mxu0 %v391
        %558 = vmatpush.bf16.msra.mxu0 %v379
        %559 = vmatmul.bf16.gmra.mxu0 %v419
        %v560 = vpop.f32.mrf.mxu0
        %v561 = vadd.f32 0.0, %v560
        %v562 = vpop.f32.mrf.mxu0
        %563 = vdwg.mxu0
        %564 = vmatpush.bf16.msra.mxu0 0
        %565 = vmatpush.bf16.msra.mxu0 0
        %566 = vmatpush.bf16.msra.mxu0 0
        %567 = vmatpush.bf16.msra.mxu0 0
        %568 = vmatpush.bf16.msra.mxu0 0
        %569 = vmatpush.bf16.msra.mxu0 0
        %570 = vmatpush.bf16.msra.mxu0 %v392
        %571 = vmatpush.bf16.msra.mxu0 %v380
        %572 = vmatmul.bf16.gmra.mxu0 %v419
        %v573 = vpop.f32.mrf.mxu0
        %v574 = vadd.f32 0.0, %v573
        %v575 = vpop.f32.mrf.mxu0
        %576 = vdwg.mxu0
        %v577 = vpack.c.bf16 %v444, %v431
        %v578 = vpack.c.bf16 %v470, %v457
        %579 = vst [vmem:[%s256] sm:$0xff] %v577
        %580 = vst [vmem:[%s256 + $0x8] sm:$0xff] %v578
        %v581 = vpack.c.bf16 %v496, %v483
        %v582 = vpack.c.bf16 %v522, %v509
        %583 = vst [vmem:[%s263] sm:$0xff] %v581
        %584 = vst [vmem:[%s263 + $0x8] sm:$0xff] %v582
        %v585 = vpack.c.bf16 %v548, %v535
        %v586 = vpack.c.bf16 %v574, %v561
        %587 = vst [vmem:[%s270] sm:$0xff] %v585
        %588 = vst [vmem:[%s270 + $0x8] sm:$0xff] %v586
        %s589 = sand.u32 %s97, 1
        %s590 = scalar_lea.sflag [#allocation4], %s589
        %s591 = sand.u32 %s97, 1
        %s592 = smul.addr %s591, 16
        %s593 = scalar_lea.vmem [#allocation7], %s592
        %s594 = sand.u32 %s26, 1
        %s595 = scalar_lea.sflag [#allocation9], %s594
        %s596 = sand.u32 %s125, 1
        %s597 = smul.addr %s596, 16
        %s598 = scalar_lea.vmem [#allocation8], %s597
        %s599 = sand.u32 %s26, 1
        %s600 = scalar_lea.sflag [#allocation9], %s599
        %s601 = sand.u32 %s153, 1
        %s602 = smul.addr %s601, 16
        %s603 = scalar_lea.vmem [#allocation10], %s602
        // Predicated region
        $region37: #{tpu_custom_call.1} parent=27 // pred_check
          %p604 = pneg %p107
        $region38: #{tpu_custom_call.1} parent=27 // pred_check_branch
          %606 = sbr.rel (%p604) target = $region40
        $region39: #{tpu_custom_call.1} parent=27 // pred_region
          %608 = vsyncadd %s590, 0
          %s609 = smul.addr %s31, 4
          %s610 = smul.addr %s30, 4
          %s611 = sadd.s32 %s609, %s610
          %s612 = smul.addr %s611, 4
          %s613 = scalar_lea.hbm %s2, %s612
          %s615 = sshll.u32 %s593, 4
          %s616 = int_to_ptr.vmem [resolvable:$true] %s615
          %s617 = sshll.u32 %s613, 4
          %s618 = int_to_ptr.hbm [resolvable:$true] %s617
          %620 = dma.vmem_to_hbm [thread:$0]  %s616, 256, %s618, %s590
        $region40: #{tpu_custom_call.1} parent=27 // pred_fallthru
          _
        // Predicated region
        $region41: #{tpu_custom_call.1} parent=27 // pred_check
          %p621 = pneg %p135
        $region42: #{tpu_custom_call.1} parent=27 // pred_check_branch
          %623 = sbr.rel (%p621) target = $region44
        $region43: #{tpu_custom_call.1} parent=27 // pred_region
          %625 = vsyncadd %s595, 0
          %s626 = smul.addr %s31, 4
          %s627 = smul.addr %s30, 4
          %s628 = sadd.s32 %s626, %s627
          %s629 = smul.addr %s628, 4
          %s630 = scalar_lea.hbm %s3, %s629
          %s632 = sshll.u32 %s598, 4
          %s633 = int_to_ptr.vmem [resolvable:$true] %s632
          %s634 = sshll.u32 %s630, 4
          %s635 = int_to_ptr.hbm [resolvable:$true] %s634
          %637 = dma.vmem_to_hbm [thread:$0]  %s633, 256, %s635, %s595
        $region44: #{tpu_custom_call.1} parent=27 // pred_fallthru
          _
        // Predicated region
        $region45: #{tpu_custom_call.1} parent=27 // pred_check
          %p638 = pneg %p163
        $region46: #{tpu_custom_call.1} parent=27 // pred_check_branch
          %640 = sbr.rel (%p638) target = $region48
        $region47: #{tpu_custom_call.1} parent=27 // pred_region
          %642 = vsyncadd %s600, 0
          %s643 = smul.addr %s31, 4
          %s644 = smul.addr %s30, 4
          %s645 = sadd.s32 %s643, %s644
          %s646 = smul.addr %s645, 4
          %s647 = scalar_lea.hbm %s4, %s646
          %s649 = sshll.u32 %s603, 4
          %s650 = int_to_ptr.vmem [resolvable:$true] %s649
          %s651 = sshll.u32 %s647, 4
          %s652 = int_to_ptr.hbm [resolvable:$true] %s651
          %654 = dma.vmem_to_hbm [thread:$0]  %s650, 256, %s652, %s600
        $region48: #{tpu_custom_call.1} parent=27 // pred_fallthru
          _
      $region28: #{tpu_custom_call.1} parent=5 // pred_fallthru
        _
      %p655 = scmp.le.s32.totalorder 2, %s21
      // Predicated region
      $region49: #{tpu_custom_call.1} parent=5 // pred_check
        %p656 = pneg %p655
      $region50: #{tpu_custom_call.1} parent=5 // pred_check_branch
        %658 = sbr.rel (%p656) target = $region52
      $region51: #{tpu_custom_call.1} parent=5 // pred_region
        %s659 = ssub.s32 %s21, 2
        // Predicated region
        $region53: #{tpu_custom_call.1} parent=51 // pred_check
          %p660 = pneg %p113
        $region54: #{tpu_custom_call.1} parent=51 // pred_check_branch
          %662 = sbr.rel (%p660) target = $region56
        $region55: #{tpu_custom_call.1} parent=51 // pred_region
          %s663 = sand.u32 %s98, 1
          %s664 = scalar_lea.sflag [#allocation4], %s663
          %s665 = sand.u32 %s98, 1
          %s666 = smul.addr %s665, 16
          %s667 = scalar_lea.vmem [#allocation7], %s666
          %669 = dma.done %s664, 256
        $region56: #{tpu_custom_call.1} parent=51 // pred_fallthru
          _
        // Predicated region
        $region57: #{tpu_custom_call.1} parent=51 // pred_check
          %p670 = pneg %p141
        $region58: #{tpu_custom_call.1} parent=51 // pred_check_branch
          %672 = sbr.rel (%p670) target = $region60
        $region59: #{tpu_custom_call.1} parent=51 // pred_region
          %s673 = sand.u32 %s27, 1
          %s674 = scalar_lea.sflag [#allocation9], %s673
          %s675 = sand.u32 %s126, 1
          %s676 = smul.addr %s675, 16
          %s677 = scalar_lea.vmem [#allocation8], %s676
          %679 = dma.done %s674, 256
        $region60: #{tpu_custom_call.1} parent=51 // pred_fallthru
          _
        // Predicated region
        $region61: #{tpu_custom_call.1} parent=51 // pred_check
          %p680 = pneg %p169
        $region62: #{tpu_custom_call.1} parent=51 // pred_check_branch
          %682 = sbr.rel (%p680) target = $region64
        $region63: #{tpu_custom_call.1} parent=51 // pred_region
          %s683 = sand.u32 %s27, 1
          %s684 = scalar_lea.sflag [#allocation9], %s683
          %s685 = sand.u32 %s154, 1
          %s686 = smul.addr %s685, 16
          %s687 = scalar_lea.vmem [#allocation10], %s686
          %689 = dma.done %s684, 256
        $region64: #{tpu_custom_call.1} parent=51 // pred_fallthru
          _
      $region52: #{tpu_custom_call.1} parent=5 // pred_fallthru
        _
    $region6: #{tpu_custom_call.1} parent=1 // loop_footer
      %s25 = sadd.s32 1, %s21
    $region7: #{tpu_custom_call.1} parent=1 // loop_footer_branch
      %20 = sbr.rel target = $region3
    $region8: #{tpu_custom_call.1} parent=1 // loop_exit
      _
    %690 = vsyncpa [#allocation3], 1
    %s691 = scalar_lea.sflag [#allocation3], 1
    %692 = vsyncpa %s691, 1
    %693 = vsyncpa [#allocation6], 1
    %694 = vsyncpa [#allocation4], 1
    %s695 = scalar_lea.sflag [#allocation4], 1
    %696 = vsyncpa %s695, 1
    %697 = vsyncpa [#allocation9], 1
    %s698 = scalar_lea.sflag [#allocation9], 1
    %699 = vsyncpa %s698, 1

</llo_original>
